<compile_context>
chip_gen: v7x
topology: tpu7x:2x2x1
jax: 0.10.0
libtpu: 0.0.40
codegen_flags: <defaults>
</compile_context>

<pallas_src>
import functools

import jax
import jax.numpy as jnp
from jax.experimental import pallas as pl
from jax.experimental.pallas import tpu as pltpu


def _se_kernel(x_ref, w1t_ref, b1_ref, w2t_ref, b2_ref, o_ref, *, inv_hw, act):
    # x_ref / o_ref: (Bt, C, HW) in the I/O dtype (HW not padded).
    # w1t_ref: (C, HID)  w2t_ref: (HID, C)  -- I/O dtype.
    # b1_ref:  (1, HID)  b2_ref:  (1, C)    -- f32.

    # ---- Pass 1: squeeze (AdaptiveAvgPool2d(1)), streamed from VMEM. ----
    # Block last dim == true HW, so this sums exactly HW elements; f32 accumulate.
    pooled = jnp.sum(x_ref[...], axis=-1, dtype=jnp.float32) * inv_hw      # (Bt, C)

    # ---- Excitation: fc1 (1x1 conv) + act, fc2 (1x1 conv) + sigmoid. ----
    y1 = jnp.dot(pooled, w1t_ref[...],
                 preferred_element_type=jnp.float32) + b1_ref[...]         # (Bt, HID)
    if act == "silu":
        y1 = y1 * jax.nn.sigmoid(y1)
    else:  # "relu" (torchvision default)
        y1 = jnp.maximum(y1, 0.0)
    y2 = jnp.dot(y1, w2t_ref[...],
                 preferred_element_type=jnp.float32) + b2_ref[...]         # (Bt, C)
    scale = jax.nn.sigmoid(y2)                                             # (Bt, C) f32

    # ---- Pass 2: re-read x from VMEM and rescale in the I/O dtype. ----
    o_ref[...] = x_ref[...] * scale[:, :, None].astype(o_ref.dtype)


def _vmem_budgets():
    """(tile_budget_bytes for the 4 double-buffered x tiles, vmem_limit_bytes)."""
    cap = 64 * 1024 * 1024  # conservative fallback = v7x per-TensorCore VMEM
    try:
        info = pltpu.get_tpu_info()
        cap = int(getattr(info, "vmem_capacity_bytes", cap)) or cap
    except Exception:
        pass
    if cap >= 100 * 1024 * 1024:          # v5e / v6e (128 MiB per TC)
        tile_budget = int(cap * 0.45)
        vmem_limit = min(int(cap * 0.80), 100 * 1024 * 1024)
    else:                                  # v7x (64 MiB per TC)
        tile_budget = int(cap * 0.30)
        vmem_limit = int(cap * 0.80)
    return tile_budget, vmem_limit


def _pick_batch_tile(B, C, HW, itemsize, tile_budget):
    """Largest divisor of B that fits the tile budget and keeps enough grid
    steps for DMA/compute overlap (and work for both v7x TensorCores)."""
    per_image = C * HW * itemsize
    max_bt = max(1, tile_budget // (4 * per_image))   # 2x in + 2x out buffers
    desired_steps = min(B, 8)                          # ~4 steps per core on v7x
    max_bt = min(max_bt, max(1, B // desired_steps))
    max_bt = max(1, min(max_bt, B))
    for bt in range(max_bt, 0, -1):
        if B % bt == 0:
            return bt
    return 1


def squeeze_excitation(x_nchw, w1, b1, w2, b2, *, act="silu"):
    """SE forward.

    x_nchw: (B, C, H, W) f32 or bf16.
    w1: (HID, C) fc1 1x1-conv weight, b1: (HID,)
    w2: (C, HID) fc2 1x1-conv weight, b2: (C,)
    """
    B, C, H, W = x_nchw.shape
    HW = H * W
    HID = w1.shape[0]
    io_dtype = x_nchw.dtype

    # Collapsing the trailing dims of a contiguous NCHW array is a metadata-only
    # reshape (no HBM copy); same for the reshape back at the end.
    x_flat = x_nchw.reshape(B, C, HW)

    # Weights in the I/O dtype (bf16 halves their VMEM footprint); f32 accumulate
    # happens in the dots.  Biases stay f32 (tiny).
    w1t = w1.T.astype(io_dtype)                     # (C, HID)
    w2t = w2.T.astype(io_dtype)                     # (HID, C)
    b1r = b1.reshape(1, HID).astype(jnp.float32)
    b2r = b2.reshape(1, C).astype(jnp.float32)

    tile_budget, vmem_limit = _vmem_budgets()
    bt = _pick_batch_tile(B, C, HW, jnp.dtype(io_dtype).itemsize, tile_budget)
    grid = (B // bt,)

    kernel = functools.partial(_se_kernel, inv_hw=float(1.0 / HW), act=act)

    out_flat = pl.pallas_call(
        kernel,
        out_shape=jax.ShapeDtypeStruct((B, C, HW), io_dtype),
        grid_spec=pltpu.PrefetchScalarGridSpec(
            num_scalar_prefetch=0,
            grid=grid,
            in_specs=[
                pl.BlockSpec((bt, C, HW), lambda b: (b, 0, 0)),   # x tile (full HW)
                pl.BlockSpec((C, HID), lambda b: (0, 0)),          # w1^T
                pl.BlockSpec((1, HID), lambda b: (0, 0)),          # b1
                pl.BlockSpec((HID, C), lambda b: (0, 0)),          # w2^T
                pl.BlockSpec((1, C), lambda b: (0, 0)),            # b2
            ],
            out_specs=pl.BlockSpec((bt, C, HW), lambda b: (b, 0, 0)),
        ),
        compiler_params=pltpu.CompilerParams(
            dimension_semantics=("parallel",),
            vmem_limit_bytes=vmem_limit),
    )(x_flat, w1t, b1r, w2t, b2r)

    return out_flat.reshape(B, C, H, W)


def reference_se(x, w1, b1, w2, b2):
    pooled = jnp.mean(x.astype(jnp.float32), axis=(2, 3))        # (B, C)
    y1 = pooled @ w1.T + b1                                      # (B, HID)
    y1 = y1 * jax.nn.sigmoid(y1)                                 # SiLU
    y2 = y1 @ w2.T + b2                                          # (B, C)
    scale = jax.nn.sigmoid(y2)[:, :, None, None]                 # (B, C, 1, 1)
    return x.astype(jnp.float32) * scale


if __name__ == "__main__":
    # hidden_channels = in_channels // 16; spatial 14x14 exercises the
    # non-lane-multiple HW path (masked last lane chunk, no padding);
    # B=4 exercises the multi-step batch grid (bt=1, 4 pipelined steps).
    B, C, H, W = 4, 32, 14, 14
    HID = C // 16  # = 2

    key = jax.random.PRNGKey(0)
    kx, k1, k2, k3, k4 = jax.random.split(key, 5)

    x = jax.random.normal(kx, (B, C, H, W), dtype=jnp.float32)
    w1 = jax.random.normal(k1, (HID, C), dtype=jnp.float32) * 0.1
    b1 = jax.random.normal(k2, (HID,), dtype=jnp.float32) * 0.1
    w2 = jax.random.normal(k3, (C, HID), dtype=jnp.float32) * 0.1
    b2 = jax.random.normal(k4, (C,), dtype=jnp.float32) * 0.1

    # f32 I/O path
    out = jax.block_until_ready(squeeze_excitation(x, w1, b1, w2, b2))
    ref = reference_se(x, w1, b1, w2, b2)
    assert out.shape == (B, C, H, W)
    assert jnp.allclose(out, ref, atol=1e-5, rtol=1e-5), "f32 mismatch vs reference"

    # bf16 I/O path (pool/FC in f32 inside the kernel; HBM traffic halves)
    x_bf16 = x.astype(jnp.bfloat16)
    out_bf16 = jax.block_until_ready(squeeze_excitation(x_bf16, w1, b1, w2, b2))
    assert out_bf16.dtype == jnp.bfloat16
    assert jnp.allclose(out_bf16.astype(jnp.float32), ref, atol=5e-2, rtol=5e-2), \
        "bf16 mismatch vs reference"

    print("KERNEL_OK")
</pallas_src>

<mosaic_0001>
module attributes {stable_mosaic.version = 11 : i64} {
  func.func @_se_kernel(%arg0: i32, %arg1: memref<1x32x196xf32, #tpu.memory_space<vmem>>, %arg2: memref<32x2xf32, #tpu.memory_space<vmem>>, %arg3: memref<1x2xf32, #tpu.memory_space<vmem>>, %arg4: memref<2x32xf32, #tpu.memory_space<vmem>>, %arg5: memref<1x32xf32, #tpu.memory_space<vmem>>, %arg6: memref<1x32x196xf32, #tpu.memory_space<vmem>>) attributes {dimension_semantics = [#tpu.dimension_semantics<parallel>], iteration_bounds = array<i64: 4>, scalar_prefetch = 0 : i64, scratch_operands = 0 : i64, tpu.core_type = #tpu.core_type<tc>, window_params = [{transform_indices = @transform_0, window_bounds = array<i64: 1, 32, 196>}, {pipeline_mode = #tpu.pipeline_mode<synchronous>, transform_indices = @transform_1, window_bounds = array<i64: 32, 2>}, {pipeline_mode = #tpu.pipeline_mode<synchronous>, transform_indices = @transform_2, window_bounds = array<i64: 1, 2>}, {pipeline_mode = #tpu.pipeline_mode<synchronous>, transform_indices = @transform_3, window_bounds = array<i64: 2, 32>}, {pipeline_mode = #tpu.pipeline_mode<synchronous>, transform_indices = @transform_4, window_bounds = array<i64: 1, 32>}, {transform_indices = @transform_5, window_bounds = array<i64: 1, 32, 196>}]} {
    %c0 = arith.constant 0 : index
    %c0_0 = arith.constant 0 : index
    %c0_1 = arith.constant 0 : index
    %0 = vector.load %arg1[%c0, %c0_0, %c0_1] : memref<1x32x196xf32, #tpu.memory_space<vmem>>, vector<1x32x196xf32>
    %cst = arith.constant dense<0.000000e+00> : vector<1x32xf32>
    %1 = vector.multi_reduction <add>, %0, %cst [2] : vector<1x32x196xf32> to vector<1x32xf32>
    %cst_2 = arith.constant 0.00510204071 : f32
    %2 = vector.broadcast %cst_2 : f32 to vector<1x32xf32>
    %3 = arith.mulf %1, %2 : vector<1x32xf32>
    %c0_3 = arith.constant 0 : index
    %c0_4 = arith.constant 0 : index
    %4 = vector.load %arg2[%c0_3, %c0_4] : memref<32x2xf32, #tpu.memory_space<vmem>>, vector<32x2xf32>
    %cst_5 = arith.constant dense<0.000000e+00> : vector<1x2xf32>
    %5 = tpu.matmul %3, %4, %cst_5 {dimension_numbers = #tpu.dot_dimension_numbers<[1], [0], [0], [1], [0, 0, 1, 1], [], []>} : vector<1x32xf32>, vector<32x2xf32>, vector<1x2xf32> -> vector<1x2xf32>
    %c0_6 = arith.constant 0 : index
    %c0_7 = arith.constant 0 : index
    %6 = vector.load %arg3[%c0_6, %c0_7] : memref<1x2xf32, #tpu.memory_space<vmem>>, vector<1x2xf32>
    %7 = arith.addf %5, %6 : vector<1x2xf32>
    %8 = arith.negf %7 : vector<1x2xf32>
    %9 = math.exp %8 : vector<1x2xf32>
    %cst_8 = arith.constant 1.000000e+00 : f32
    %10 = vector.broadcast %cst_8 : f32 to vector<1x2xf32>
    %11 = arith.addf %10, %9 : vector<1x2xf32>
    %12 = arith.divf %10, %11 : vector<1x2xf32>
    %13 = arith.mulf %7, %12 : vector<1x2xf32>
    %c0_9 = arith.constant 0 : index
    %c0_10 = arith.constant 0 : index
    %14 = vector.load %arg4[%c0_9, %c0_10] : memref<2x32xf32, #tpu.memory_space<vmem>>, vector<2x32xf32>
    %cst_11 = arith.constant dense<0.000000e+00> : vector<1x32xf32>
    %15 = tpu.matmul %13, %14, %cst_11 {dimension_numbers = #tpu.dot_dimension_numbers<[1], [0], [0], [1], [0, 0, 1, 1], [], []>} : vector<1x2xf32>, vector<2x32xf32>, vector<1x32xf32> -> vector<1x32xf32>
    %c0_12 = arith.constant 0 : index
    %c0_13 = arith.constant 0 : index
    %16 = vector.load %arg5[%c0_12, %c0_13] : memref<1x32xf32, #tpu.memory_space<vmem>>, vector<1x32xf32>
    %17 = arith.addf %15, %16 : vector<1x32xf32>
    %18 = arith.negf %17 : vector<1x32xf32>
    %19 = math.exp %18 : vector<1x32xf32>
    %cst_14 = arith.constant 1.000000e+00 : f32
    %20 = vector.broadcast %cst_14 : f32 to vector<1x32xf32>
    %21 = arith.addf %20, %19 : vector<1x32xf32>
    %22 = arith.divf %20, %21 : vector<1x32xf32>
    %c0_15 = arith.constant 0 : index
    %c0_16 = arith.constant 0 : index
    %c0_17 = arith.constant 0 : index
    %23 = vector.load %arg1[%c0_15, %c0_16, %c0_17] : memref<1x32x196xf32, #tpu.memory_space<vmem>>, vector<1x32x196xf32>
    %24 = vector.shape_cast %22 : vector<1x32xf32> to vector<1x32x1xf32>
    %25 = vector.broadcast %24 : vector<1x32x1xf32> to vector<1x32x196xf32>
    %26 = arith.mulf %23, %25 : vector<1x32x196xf32>
    %c0_18 = arith.constant 0 : index
    %c0_19 = arith.constant 0 : index
    %c0_20 = arith.constant 0 : index
    %27 = vector.load %arg6[%c0_18, %c0_19, %c0_20] : memref<1x32x196xf32, #tpu.memory_space<vmem>>, vector<1x32x196xf32>
    tpu.vector_store %arg6[%c0_18, %c0_19, %c0_20], %26 {strides = array<i32>} : memref<1x32x196xf32, #tpu.memory_space<vmem>>, vector<1x32x196xf32>,
    return
  }
  func.func @transform_0(%arg0: i32) -> (i32, i32, i32) {
    %c0_i32 = arith.constant 0 : i32
    %c0_i32_0 = arith.constant 0 : i32
    %c0_i32_1 = arith.constant 0 : i32
    return %arg0, %c0_i32, %c0_i32_0 : i32, i32, i32
  }
  func.func @transform_1(%arg0: i32) -> (i32, i32) {
    %c0_i32 = arith.constant 0 : i32
    %c0_i32_0 = arith.constant 0 : i32
    %c0_i32_1 = arith.constant 0 : i32
    return %c0_i32, %c0_i32_0 : i32, i32
  }
  func.func @transform_2(%arg0: i32) -> (i32, i32) {
    %c0_i32 = arith.constant 0 : i32
    %c0_i32_0 = arith.constant 0 : i32
    %c0_i32_1 = arith.constant 0 : i32
    return %c0_i32, %c0_i32_0 : i32, i32
  }
  func.func @transform_3(%arg0: i32) -> (i32, i32) {
    %c0_i32 = arith.constant 0 : i32
    %c0_i32_0 = arith.constant 0 : i32
    %c0_i32_1 = arith.constant 0 : i32
    return %c0_i32, %c0_i32_0 : i32, i32
  }
  func.func @transform_4(%arg0: i32) -> (i32, i32) {
    %c0_i32 = arith.constant 0 : i32
    %c0_i32_0 = arith.constant 0 : i32
    %c0_i32_1 = arith.constant 0 : i32
    return %c0_i32, %c0_i32_0 : i32, i32
  }
  func.func @transform_5(%arg0: i32) -> (i32, i32, i32) {
    %c0_i32 = arith.constant 0 : i32
    %c0_i32_0 = arith.constant 0 : i32
    %c0_i32_1 = arith.constant 0 : i32
    return %arg0, %c0_i32, %c0_i32_0 : i32, i32, i32
  }
}

</mosaic_0001>

<llo_original>
// kernel: tpu_custom_call.1
$region0: #{tpu_custom_call.1}
  #allocation0 [shape = 'u32[]', space=smem, size = 0x4, offset = 0x4, fixed_abs, tag = 'smem constant byte address 0x4 - core index']
  #allocation1 [shape = 'u32[144,128]{1,0:T(1,128)}', space=vmem, size = 0x12000, scoped, tag = 'internal scratch']
  %s0 = inlined_call_operand.hbm [shape: f32[4,32,196], index: 0, kind: input, shape index: {}]
  %s1 = inlined_call_operand.vmem [shape: f32[32,2], index: 1, kind: input, shape index: {}]
  %s2 = inlined_call_operand.vmem [shape: f32[1,2], index: 2, kind: input, shape index: {}]
  %s3 = inlined_call_operand.vmem [shape: f32[2,32], index: 3, kind: input, shape index: {}]
  %s4 = inlined_call_operand.vmem [shape: f32[1,32], index: 4, kind: input, shape index: {}]
  %s5 = inlined_call_operand.hbm [shape: f32[4,32,196], index: 5, kind: output, shape index: {}]
  %s6 = sld [smem:[#allocation0]]
  $region57: #{tpu_custom_call.1} parent=0
    _
  %s8 = ssub.s32 1, %s6
  %s9 = scalar_select 0, %s8, %s6
  $region1: #{tpu_custom_call.1} parent=0
    #allocation2 [shape = 'u8[65536]{0}', space=vmem, size = 0x10000, scoped, tag = 'input window, operand 0']
    #allocation3 [shape = 's32[2]{0}', space=sflag, size = 0x8, scoped, tag = 'scoped memory for tpu_custom_call.1']
    #allocation4 [shape = 's32[2]{0}', space=sflag, size = 0x8, scoped, tag = 'scoped memory for tpu_custom_call.1']
    #allocation5 [shape = 'u8[65536]{0}', space=vmem, size = 0x10000, scoped, tag = 'output window, operand 0']
    %10 = vsyncpa [#allocation3], 0
    %s11 = scalar_lea.sflag [#allocation3], 1
    %12 = vsyncpa %s11, 0
    %13 = vsyncpa [#allocation4], 0
    %s14 = scalar_lea.sflag [#allocation4], 1
    %15 = vsyncpa %s14, 0
    loop: start=0, step=1, limit=6
    $region2: #{tpu_custom_call.1} parent=1 // loop_pre_header
      _
    $region3: #{tpu_custom_call.1} parent=1 // loop_header
      %s17 = sphi 0, %s21
      %p18 = scmp.ge.s32.totalorder %s17, 6
      %s27 = sphi 0, %s29
      %s30 = sphi 0, %s27
      %s31 = sphi 0, %s30
      %s47 = sphi 0, %s31
      %s51 = sphi 0, %s51
      %s53 = sphi 0, %s51
      %s54 = sphi 0, %s53
      %s68 = sphi 0, %s54
      %s72 = sphi 0, %s72
      %s74 = sphi 0, %s72
      %s75 = sphi 0, %s74
      %s89 = sphi 0, %s75
      %s93 = sphi 0, %s93
      %s95 = sphi 0, %s93
      %s96 = sphi 0, %s95
      %s110 = sphi 0, %s96
      %s114 = sphi 0, %s114
      %s116 = sphi 0, %s114
      %s117 = sphi 0, %s116
      %s131 = sphi 0, %s117
      %s137 = sphi 0, %s139
      %s140 = sphi 0, %s137
      %s141 = sphi 0, %s140
      %s157 = sphi 0, %s141
    $region4: #{tpu_custom_call.1} parent=1 // loop_header_branch
      %20 = sbr.rel (%p18) target = $region8
    $region5: #{tpu_custom_call.1} parent=1 // loop_body
      %s22 = ssub.s32 %s17, 1
      %s23 = ssub.s32 %s17, 2
      %s24 = sadd.s32 %s17, 1
      %s25 = ssub.s32 %s17, %s24
      %p26 = scmp.eq.s32.totalorder %s25, 0
      %s28 = sadd.s32 %s27, 1
      %s29 = scalar_select %p26, %s27, %s28
      %p32 = pneg %p26
      %p33 = scmp.eq.s32.totalorder %s17, 3
      %p34 = por %p32, %p33
      %p35 = scmp.ne.s32.totalorder %s27, %s30
      %p36 = scmp.eq.s32.totalorder %s17, 0
      %p37 = por %p35, %p36
      %p38 = scmp.ne.s32.totalorder %s27, %s30
      %p39 = scmp.eq.s32.totalorder %s22, 3
      %p40 = por %p38, %p39
      %p41 = scmp.ne.s32.totalorder %s30, %s31
      %p42 = scmp.eq.s32.totalorder %s22, 0
      %p43 = por %p41, %p42
      %p44 = scmp.ne.s32.totalorder %s30, %s31
      %p45 = scmp.eq.s32.totalorder %s23, 3
      %p46 = por %p44, %p45
      %p48 = scmp.ne.s32.totalorder %s31, %s47
      %p49 = scmp.eq.s32.totalorder %s23, 0
      %p50 = por %p48, %p49
      %s52 = sadd.s32 %s51, 1
      %p55 = scmp.eq.s32.totalorder %s17, 3
      %p56 = scmp.ne.s32.totalorder %s51, %s53
      %p57 = scmp.eq.s32.totalorder %s17, 0
      %p58 = por %p56, %p57
      %p59 = scmp.ne.s32.totalorder %s51, %s53
      %p60 = scmp.eq.s32.totalorder %s22, 3
      %p61 = por %p59, %p60
      %p62 = scmp.ne.s32.totalorder %s53, %s54
      %p63 = scmp.eq.s32.totalorder %s22, 0
      %p64 = por %p62, %p63
      %p65 = scmp.ne.s32.totalorder %s53, %s54
      %p66 = scmp.eq.s32.totalorder %s23, 3
      %p67 = por %p65, %p66
      %p69 = scmp.ne.s32.totalorder %s54, %s68
      %p70 = scmp.eq.s32.totalorder %s23, 0
      %p71 = por %p69, %p70
      %s73 = sadd.s32 %s72, 1
      %p76 = scmp.eq.s32.totalorder %s17, 3
      %p77 = scmp.ne.s32.totalorder %s72, %s74
      %p78 = scmp.eq.s32.totalorder %s17, 0
      %p79 = por %p77, %p78
      %p80 = scmp.ne.s32.totalorder %s72, %s74
      %p81 = scmp.eq.s32.totalorder %s22, 3
      %p82 = por %p80, %p81
      %p83 = scmp.ne.s32.totalorder %s74, %s75
      %p84 = scmp.eq.s32.totalorder %s22, 0
      %p85 = por %p83, %p84
      %p86 = scmp.ne.s32.totalorder %s74, %s75
      %p87 = scmp.eq.s32.totalorder %s23, 3
      %p88 = por %p86, %p87
      %p90 = scmp.ne.s32.totalorder %s75, %s89
      %p91 = scmp.eq.s32.totalorder %s23, 0
      %p92 = por %p90, %p91
      %s94 = sadd.s32 %s93, 1
      %p97 = scmp.eq.s32.totalorder %s17, 3
      %p98 = scmp.ne.s32.totalorder %s93, %s95
      %p99 = scmp.eq.s32.totalorder %s17, 0
      %p100 = por %p98, %p99
      %p101 = scmp.ne.s32.totalorder %s93, %s95
      %p102 = scmp.eq.s32.totalorder %s22, 3
      %p103 = por %p101, %p102
      %p104 = scmp.ne.s32.totalorder %s95, %s96
      %p105 = scmp.eq.s32.totalorder %s22, 0
      %p106 = por %p104, %p105
      %p107 = scmp.ne.s32.totalorder %s95, %s96
      %p108 = scmp.eq.s32.totalorder %s23, 3
      %p109 = por %p107, %p108
      %p111 = scmp.ne.s32.totalorder %s96, %s110
      %p112 = scmp.eq.s32.totalorder %s23, 0
      %p113 = por %p111, %p112
      %s115 = sadd.s32 %s114, 1
      %p118 = scmp.eq.s32.totalorder %s17, 3
      %p119 = scmp.ne.s32.totalorder %s114, %s116
      %p120 = scmp.eq.s32.totalorder %s17, 0
      %p121 = por %p119, %p120
      %p122 = scmp.ne.s32.totalorder %s114, %s116
      %p123 = scmp.eq.s32.totalorder %s22, 3
      %p124 = por %p122, %p123
      %p125 = scmp.ne.s32.totalorder %s116, %s117
      %p126 = scmp.eq.s32.totalorder %s22, 0
      %p127 = por %p125, %p126
      %p128 = scmp.ne.s32.totalorder %s116, %s117
      %p129 = scmp.eq.s32.totalorder %s23, 3
      %p130 = por %p128, %p129
      %p132 = scmp.ne.s32.totalorder %s117, %s131
      %p133 = scmp.eq.s32.totalorder %s23, 0
      %p134 = por %p132, %p133
      %s135 = ssub.s32 %s17, %s24
      %p136 = scmp.eq.s32.totalorder %s135, 0
      %s138 = sadd.s32 %s137, 1
      %s139 = scalar_select %p136, %s137, %s138
      %p142 = pneg %p136
      %p143 = scmp.eq.s32.totalorder %s17, 3
      %p144 = por %p142, %p143
      %p145 = scmp.ne.s32.totalorder %s137, %s140
      %p146 = scmp.eq.s32.totalorder %s17, 0
      %p147 = por %p145, %p146
      %p148 = scmp.ne.s32.totalorder %s137, %s140
      %p149 = scmp.eq.s32.totalorder %s22, 3
      %p150 = por %p148, %p149
      %p151 = scmp.ne.s32.totalorder %s140, %s141
      %p152 = scmp.eq.s32.totalorder %s22, 0
      %p153 = por %p151, %p152
      %p154 = scmp.ne.s32.totalorder %s140, %s141
      %p155 = scmp.eq.s32.totalorder %s23, 3
      %p156 = por %p154, %p155
      %p158 = scmp.ne.s32.totalorder %s141, %s157
      %p159 = scmp.eq.s32.totalorder %s23, 0
      %p160 = por %p158, %p159
      %p161 = scmp.le.s32.totalorder 1, %s17
      %p162 = scmp.lt.s32.totalorder %s17, 5
      %p163 = pnand %p161, %p162
      %p164 = pneg %p163
      // Predicated region
      $region9: #{tpu_custom_call.1} parent=5 // pred_check
        _
      $region10: #{tpu_custom_call.1} parent=5 // pred_check_branch
        %166 = sbr.rel (%p163) target = $region12
      $region11: #{tpu_custom_call.1} parent=5 // pred_region
        %s167 = ssub.s32 %s17, 1
        // Predicated region
        $region13: #{tpu_custom_call.1} parent=11 // pred_check
          %p168 = pneg %p64
        $region14: #{tpu_custom_call.1} parent=11 // pred_check_branch
          %170 = sbr.rel (%p168) target = $region16
        $region15: #{tpu_custom_call.1} parent=11 // pred_region
          _
        $region16: #{tpu_custom_call.1} parent=11 // pred_fallthru
          _
        // Predicated region
        $region17: #{tpu_custom_call.1} parent=11 // pred_check
          %p171 = pneg %p85
        $region18: #{tpu_custom_call.1} parent=11 // pred_check_branch
          %173 = sbr.rel (%p171) target = $region20
        $region19: #{tpu_custom_call.1} parent=11 // pred_region
          _
        $region20: #{tpu_custom_call.1} parent=11 // pred_fallthru
          _
        // Predicated region
        $region21: #{tpu_custom_call.1} parent=11 // pred_check
          %p174 = pneg %p106
        $region22: #{tpu_custom_call.1} parent=11 // pred_check_branch
          %176 = sbr.rel (%p174) target = $region24
        $region23: #{tpu_custom_call.1} parent=11 // pred_region
          _
        $region24: #{tpu_custom_call.1} parent=11 // pred_fallthru
          _
        // Predicated region
        $region25: #{tpu_custom_call.1} parent=11 // pred_check
          %p177 = pneg %p127
        $region26: #{tpu_custom_call.1} parent=11 // pred_check_branch
          %179 = sbr.rel (%p177) target = $region28
        $region27: #{tpu_custom_call.1} parent=11 // pred_region
          _
        $region28: #{tpu_custom_call.1} parent=11 // pred_fallthru
          _
      $region12: #{tpu_custom_call.1} parent=5 // pred_fallthru
        _
      %p180 = scmp.lt.s32.totalorder %s17, 4
      // Predicated region
      $region29: #{tpu_custom_call.1} parent=5 // pred_check
        %p181 = pneg %p180
      $region30: #{tpu_custom_call.1} parent=5 // pred_check_branch
        %183 = sbr.rel (%p181) target = $region32
      $region31: #{tpu_custom_call.1} parent=5 // pred_region
        // Predicated region
        $region33: #{tpu_custom_call.1} parent=31 // pred_check
          %p184 = pneg %p37
        $region34: #{tpu_custom_call.1} parent=31 // pred_check_branch
          %186 = sbr.rel (%p184) target = $region36
        $region35: #{tpu_custom_call.1} parent=31 // pred_region
          %s187 = sand.u32 %s27, 1
          %s188 = scalar_lea.sflag [#allocation3], %s187
          %s189 = sand.u32 %s27, 1
          %s190 = smul.addr %s189, 64
          %s191 = scalar_lea.vmem [#allocation2], %s190
          %s193 = ssub.s32 1024, 1024
          %194 = vsyncadd %s188, %s193
          %s195 = smul.addr %s17, 8
          %s196 = smul.addr %s195, 128
          %s197 = scalar_lea.hbm %s0, %s196
          %s198 = sshll.u32 %s191, 4
          %s199 = int_to_ptr.vmem [resolvable:$true] %s198
          %204 = dma.hbm_to_vmem [thread:$0]  %s197, 1024, %s199, %s188, 256, 256, 16
        $region36: #{tpu_custom_call.1} parent=31 // pred_fallthru
          _
      $region32: #{tpu_custom_call.1} parent=5 // pred_fallthru
        _
      %p205 = scmp.le.s32.totalorder 1, %s17
      %p206 = scmp.lt.s32.totalorder %s17, 5
      %p207 = pnand %p205, %p206
      %p208 = pneg %p207
      // Predicated region
      $region37: #{tpu_custom_call.1} parent=5 // pred_check
        _
      $region38: #{tpu_custom_call.1} parent=5 // pred_check_branch
        %210 = sbr.rel (%p207) target = $region40
      $region39: #{tpu_custom_call.1} parent=5 // pred_region
        %s211 = ssub.s32 %s17, 1
        %s212 = sand.u32 %s30, 1
        %s213 = scalar_lea.sflag [#allocation3], %s212
        %s214 = sand.u32 %s30, 1
        %s215 = smul.addr %s214, 64
        %s216 = scalar_lea.vmem [#allocation2], %s215
        // Predicated region
        $region41: #{tpu_custom_call.1} parent=39 // pred_check
          %p217 = pneg %p43
        $region42: #{tpu_custom_call.1} parent=39 // pred_check_branch
          %219 = sbr.rel (%p217) target = $region44
        $region43: #{tpu_custom_call.1} parent=39 // pred_region
          %220 = dma.done %s213, 1024
        $region44: #{tpu_custom_call.1} parent=39 // pred_fallthru
          _
        %s221 = sand.u32 %s30, 1
        %s222 = scalar_lea.sflag [#allocation3], %s221
        %s223 = sand.u32 %s30, 1
        %s224 = smul.addr %s223, 64
        %s225 = scalar_lea.vmem [#allocation2], %s224
        %p226 = pneg %p43
        %p227 = pneg %p40
        %p228 = pneg %p64
        %p229 = pneg %p61
        %p230 = pneg %p85
        %p231 = pneg %p82
        %p232 = pneg %p106
        %p233 = pneg %p103
        %p234 = pneg %p127
        %p235 = pneg %p124
        %p236 = pneg %p153
        %p237 = pneg %p150
        %s238 = sand.u32 %s140, 1
        %s239 = scalar_lea.sflag [#allocation4], %s238
        %s240 = sand.u32 %s140, 1
        %s241 = smul.addr %s240, 64
        %s242 = scalar_lea.vmem [#allocation5], %s241
        %v243 = vld [vmem:[%s216] sm:$0xff]
        %v244 = vld [vmem:[%s216 + $0x8] sm:$0xff]
        %v245 = vld [vmem:[%s216 + $0x10] sm:$0xff]
        %v246 = vld [vmem:[%s216 + $0x18] sm:$0xff]
        %v247 = vld [vmem:[%s216 + $0x20] sm:$0xff]
        %v248 = vld [vmem:[%s216 + $0x28] sm:$0xff]
        %v249 = vld [vmem:[%s216 + $0x30] sm:$0xff]
        %v250 = vld [vmem:[%s216 + $0x38] sm:$0xff]
        %vm251 = vcmask 556032
        %v252 = vsel %vm251, %v244, 0.0
        %v253 = vadd.f32 %v243, %v252
        %254 = vadd.xlane.f32.xlu0 %v253
        %v255 = vpop.xlane.xlu0 %254
        %v256 = vsel %vm251, %v246, 0.0
        %v257 = vadd.f32 %v245, %v256
        %258 = vadd.xlane.f32.xlu0 %v257
        %v259 = vpop.xlane.xlu0 %258
        %v260 = vsel %vm251, %v248, 0.0
        %v261 = vadd.f32 %v247, %v260
        %262 = vadd.xlane.f32.xlu0 %v261
        %v263 = vpop.xlane.xlu0 %262
        %v264 = vsel %vm251, %v250, 0.0
        %v265 = vadd.f32 %v249, %v264
        %266 = vadd.xlane.f32.xlu0 %v265
        %v267 = vpop.xlane.xlu0 %266
        %v268 = vmul.f32 %v255, 0.0051020407
        %v269 = vmul.f32 %v259, 0.0051020407
        %v270 = vmul.f32 %v263, 0.0051020407
        %v271 = vmul.f32 %v267, 0.0051020407
        %v272 = vld [vmem:[%s1] sm:$0xff]
        %v273 = vld [vmem:[%s1 + $0x8] sm:$0xff]
        %v274 = vld [vmem:[%s1 + $0x10] sm:$0xff]
        %v275 = vld [vmem:[%s1 + $0x18] sm:$0xff]
        %v276 = vld [vmem:[%s2] sm:$0x1]
        %v281 = vlaneseq
        %v282 = vand.u32 %v281, 127
        %v283 = vlaneseq
        %v284 = vshrl.u32 %v283, 7
        %v285 = vsub.s32 %v282, %v284
        %v286 = vrot.slane %v268, %v285
        %v287 = vadd.s32 %v282, 4294967288
        %v288 = vlaneseq
        %v289 = vshrl.u32 %v288, 7
        %v290 = vsub.s32 %v287, %v289
        %v291 = vrot.slane %v269, %v290
        %vm292 = vcmask 130112
        %v293 = vsel %vm292, %v291, %v286
        %v294 = vadd.s32 %v282, 4294967280
        %v295 = vlaneseq
        %v296 = vshrl.u32 %v295, 7
        %v297 = vsub.s32 %v294, %v296
        %v298 = vrot.slane %v270, %v297
        %vm299 = vcmask 195712
        %v300 = vsel %vm299, %v298, %v293
        %v301 = vadd.s32 %v282, 4294967272
        %v302 = vlaneseq
        %v303 = vshrl.u32 %v302, 7
        %v304 = vsub.s32 %v301, %v303
        %v305 = vrot.slane %v271, %v304
        %vm306 = vcmask 261312
        %v307 = vsel %vm306, %v305, %v300
        %vm308 = vcmask 261120
        %v309 = vsel %vm308, %v307, 0
        %311 = vmatprep.subr.mxu0 0.0
        %312 = vmatpush1.msra.mxu0 %v272
        %313 = vmatprep.subr.mxu0 0.0
        %314 = vmatpush1.msra.mxu0 %v273
        %315 = vmatprep.subr.mxu0 0.0
        %316 = vmatpush1.msra.mxu0 %v274
        %317 = vmatprep.subr.mxu0 0.0
        %318 = vmatpush1.msra.mxu0 %v275
        %319 = vmatprep.subr.mxu0 0.0
        %320 = vmatpush1.msra.mxu0 0.0
        %321 = vmatprep.subr.mxu0 0.0
        %322 = vmatpush1.msra.mxu0 0.0
        %323 = vmatprep.subr.mxu0 0.0
        %324 = vmatpush1.msra.mxu0 0.0
        %325 = vmatprep.subr.mxu0 0.0
        %326 = vmatpush1.msra.mxu0 0.0
        %327 = vmatprep.subr.mxu0 0.0
        %328 = vmatpush1.msra.mxu0 0.0
        %329 = vmatprep.subr.mxu0 0.0
        %330 = vmatpush1.msra.mxu0 0.0
        %331 = vmatprep.subr.mxu0 0.0
        %332 = vmatpush1.msra.mxu0 0.0
        %333 = vmatprep.subr.mxu0 0.0
        %334 = vmatpush1.msra.mxu0 0.0
        %335 = vmatprep.subr.mxu0 0.0
        %336 = vmatpush1.msra.mxu0 0.0
        %337 = vmatprep.subr.mxu0 0.0
        %338 = vmatpush1.msra.mxu0 0.0
        %339 = vmatprep.subr.mxu0 0.0
        %340 = vmatpush1.msra.mxu0 0.0
        %341 = vmatprep.subr.mxu0 0.0
        %342 = vmatpush1.msra.mxu0 0.0
        %343 = vmatprep.subr.mxu0 0.0
        %344 = vmatpush1.msra.mxu0 0.0
        %345 = vmatprep.subr.mxu0 0.0
        %346 = vmatpush1.msra.mxu0 0.0
        %347 = vmatprep.subr.mxu0 0.0
        %348 = vmatpush1.msra.mxu0 0.0
        %349 = vmatprep.subr.mxu0 0.0
        %350 = vmatpush1.msra.mxu0 0.0
        %351 = vmatprep.subr.mxu0 0.0
        %352 = vmatpush1.msra.mxu0 0.0
        %353 = vmatprep.subr.mxu0 0.0
        %354 = vmatpush1.msra.mxu0 0.0
        %355 = vmatprep.subr.mxu0 0.0
        %356 = vmatpush1.msra.mxu0 0.0
        %357 = vmatprep.subr.mxu0 0.0
        %358 = vmatpush1.msra.mxu0 0.0
        %359 = vmatprep.subr.mxu0 0.0
        %360 = vmatpush1.msra.mxu0 0.0
        %361 = vmatprep.subr.mxu0 0.0
        %362 = vmatpush1.msra.mxu0 0.0
        %363 = vmatprep.subr.mxu0 0.0
        %364 = vmatpush1.msra.mxu0 0.0
        %365 = vmatprep.subr.mxu0 0.0
        %366 = vmatpush1.msra.mxu0 0.0
        %367 = vmatprep.subr.mxu0 0.0
        %368 = vmatpush1.msra.mxu0 0.0
        %369 = vmatprep.subr.mxu0 0.0
        %370 = vmatpush1.msra.mxu0 0.0
        %371 = vmatprep.subr.mxu0 0.0
        %372 = vmatpush1.msra.mxu0 0.0
        %373 = vmatprep.subr.mxu0 0.0
        %374 = vmatpush1.msra.mxu0 0.0
        %375 = vmatprep.mubr.f32.mxu0 0.0
        %376 = vmatmul.mubr.f32.gmra.mrb[0].mxu0 %v309
        %v377 = vpop.f32.mrb[0].mxu0
        %v378 = vadd.f32 %v276, %v377
        %v379 = vpop.f32.mrb[0].mxu0
        %380 = vdwg.mxu0
        %v381 = vxor.u32 %v378, 2147483648
        %v382 = vmul.f32 %v381, 1.442695
        %v383 = vpow.pop %v382
        %v384 = vadd.f32 %v383, 1.0
        %v385 = vrcp.pop %v384
        %v386 = vmul.f32 1.0, %v385
        %v387 = vmul.f32 %v378, %v386
        %v388 = vld [vmem:[%s3] sm:$0x3]
        %v389 = vld [vmem:[%s4] sm:$0x1]
        %vm390 = vcmask 15360
        %v392 = vsel %vm390, %v387, 0
        %vm394 = vcmask 1041408
        %v396 = vsel %vm394, %v388, 0
        %398 = vmatprep.subr.mxu0 0.0
        %399 = vmatpush1.msra.mxu0 %v396
        %400 = vmatprep.subr.mxu0 0.0
        %401 = vmatpush1.msra.mxu0 0.0
        %402 = vmatprep.subr.mxu0 0.0
        %403 = vmatpush1.msra.mxu0 0.0
        %404 = vmatprep.subr.mxu0 0.0
        %405 = vmatpush1.msra.mxu0 0.0
        %406 = vmatprep.subr.mxu0 0.0
        %407 = vmatpush1.msra.mxu0 0.0
        %408 = vmatprep.subr.mxu0 0.0
        %409 = vmatpush1.msra.mxu0 0.0
        %410 = vmatprep.subr.mxu0 0.0
        %411 = vmatpush1.msra.mxu0 0.0
        %412 = vmatprep.subr.mxu0 0.0
        %413 = vmatpush1.msra.mxu0 0.0
        %414 = vmatprep.subr.mxu0 0.0
        %415 = vmatpush1.msra.mxu0 0.0
        %416 = vmatprep.subr.mxu0 0.0
        %417 = vmatpush1.msra.mxu0 0.0
        %418 = vmatprep.subr.mxu0 0.0
        %419 = vmatpush1.msra.mxu0 0.0
        %420 = vmatprep.subr.mxu0 0.0
        %421 = vmatpush1.msra.mxu0 0.0
        %422 = vmatprep.subr.mxu0 0.0
        %423 = vmatpush1.msra.mxu0 0.0
        %424 = vmatprep.subr.mxu0 0.0
        %425 = vmatpush1.msra.mxu0 0.0
        %426 = vmatprep.subr.mxu0 0.0
        %427 = vmatpush1.msra.mxu0 0.0
        %428 = vmatprep.subr.mxu0 0.0
        %429 = vmatpush1.msra.mxu0 0.0
        %430 = vmatprep.subr.mxu0 0.0
        %431 = vmatpush1.msra.mxu0 0.0
        %432 = vmatprep.subr.mxu0 0.0
        %433 = vmatpush1.msra.mxu0 0.0
        %434 = vmatprep.subr.mxu0 0.0
        %435 = vmatpush1.msra.mxu0 0.0
        %436 = vmatprep.subr.mxu0 0.0
        %437 = vmatpush1.msra.mxu0 0.0
        %438 = vmatprep.subr.mxu0 0.0
        %439 = vmatpush1.msra.mxu0 0.0
        %440 = vmatprep.subr.mxu0 0.0
        %441 = vmatpush1.msra.mxu0 0.0
        %442 = vmatprep.subr.mxu0 0.0
        %443 = vmatpush1.msra.mxu0 0.0
        %444 = vmatprep.subr.mxu0 0.0
        %445 = vmatpush1.msra.mxu0 0.0
        %446 = vmatprep.subr.mxu0 0.0
        %447 = vmatpush1.msra.mxu0 0.0
        %448 = vmatprep.subr.mxu0 0.0
        %449 = vmatpush1.msra.mxu0 0.0
        %450 = vmatprep.subr.mxu0 0.0
        %451 = vmatpush1.msra.mxu0 0.0
        %452 = vmatprep.subr.mxu0 0.0
        %453 = vmatpush1.msra.mxu0 0.0
        %454 = vmatprep.subr.mxu0 0.0
        %455 = vmatpush1.msra.mxu0 0.0
        %456 = vmatprep.subr.mxu0 0.0
        %457 = vmatpush1.msra.mxu0 0.0
        %458 = vmatprep.subr.mxu0 0.0
        %459 = vmatpush1.msra.mxu0 0.0
        %460 = vmatprep.subr.mxu0 0.0
        %461 = vmatpush1.msra.mxu0 0.0
        %462 = vmatprep.mubr.f32.mxu0 0.0
        %463 = vmatmul.mubr.f32.gmra.mrb[0].mxu0 %v392
        %v464 = vpop.f32.mrb[0].mxu0
        %v465 = vadd.f32 %v389, %v464
        %v466 = vpop.f32.mrb[0].mxu0
        %467 = vdwg.mxu0
        %v468 = vxor.u32 %v465, 2147483648
        %v469 = vmul.f32 %v468, 1.442695
        %v470 = vpow.pop %v469
        %v471 = vadd.f32 %v470, 1.0
        %v472 = vrcp.pop %v471
        %v473 = vmul.f32 1.0, %v472
        %v474 = vlaneseq
        %v475 = vshrl.u32 %v474, 7
        %v476 = vsub.s32 0, %v475
        %v477 = vrot.slane %v473, %v476
        %479 = vbcast.lane.b32.xlu0 %v477, 256
        %v480 = vpop.permute.xlu0 %479
        %s482 = sor.u32 256, 8
        %483 = vbcast.lane.b32.xlu0 %v477, %s482
        %v484 = vpop.permute.xlu0 %483
        %s486 = sor.u32 256, 16
        %487 = vbcast.lane.b32.xlu0 %v477, %s486
        %v488 = vpop.permute.xlu0 %487
        %s490 = sor.u32 256, 24
        %491 = vbcast.lane.b32.xlu0 %v477, %s490
        %v492 = vpop.permute.xlu0 %491
        %v493 = vmul.f32 %v243, %v480
        %v494 = vmul.f32 %v244, %v480
        %v495 = vmul.f32 %v245, %v484
        %v496 = vmul.f32 %v246, %v484
        %v497 = vmul.f32 %v247, %v488
        %v498 = vmul.f32 %v248, %v488
        %v499 = vmul.f32 %v249, %v492
        %v500 = vmul.f32 %v250, %v492
        %501 = vst [vmem:[%s242] sm:$0xff] %v493
        %502 = vst.msk [vmem:[%s242 + $0x8] sm:$0xff] %vm251, %v494
        %503 = vst [vmem:[%s242 + $0x10] sm:$0xff] %v495
        %504 = vst.msk [vmem:[%s242 + $0x18] sm:$0xff] %vm251, %v496
        %505 = vst [vmem:[%s242 + $0x20] sm:$0xff] %v497
        %506 = vst.msk [vmem:[%s242 + $0x28] sm:$0xff] %vm251, %v498
        %507 = vst [vmem:[%s242 + $0x30] sm:$0xff] %v499
        %508 = vst.msk [vmem:[%s242 + $0x38] sm:$0xff] %vm251, %v500
        %s509 = sand.u32 %s140, 1
        %s510 = scalar_lea.sflag [#allocation4], %s509
        %s511 = sand.u32 %s140, 1
        %s512 = smul.addr %s511, 64
        %s513 = scalar_lea.vmem [#allocation5], %s512
        // Predicated region
        $region45: #{tpu_custom_call.1} parent=39 // pred_check
          %p514 = pneg %p150
        $region46: #{tpu_custom_call.1} parent=39 // pred_check_branch
          %516 = sbr.rel (%p514) target = $region48
        $region47: #{tpu_custom_call.1} parent=39 // pred_region
          %s518 = ssub.s32 1024, 1024
          %519 = vsyncadd %s510, %s518
          %s520 = smul.addr %s22, 8
          %s521 = smul.addr %s520, 128
          %s522 = scalar_lea.hbm %s5, %s521
          %s523 = sshll.u32 %s513, 4
          %s524 = int_to_ptr.vmem [resolvable:$true] %s523
          %529 = dma.vmem_to_hbm [thread:$0]  %s524, 1024, %s522, %s510, 256, 256, 16
        $region48: #{tpu_custom_call.1} parent=39 // pred_fallthru
          _
      $region40: #{tpu_custom_call.1} parent=5 // pred_fallthru
        _
      %p530 = scmp.le.s32.totalorder 2, %s17
      // Predicated region
      $region49: #{tpu_custom_call.1} parent=5 // pred_check
        %p531 = pneg %p530
      $region50: #{tpu_custom_call.1} parent=5 // pred_check_branch
        %533 = sbr.rel (%p531) target = $region52
      $region51: #{tpu_custom_call.1} parent=5 // pred_region
        %s534 = ssub.s32 %s17, 2
        // Predicated region
        $region53: #{tpu_custom_call.1} parent=51 // pred_check
          %p535 = pneg %p156
        $region54: #{tpu_custom_call.1} parent=51 // pred_check_branch
          %537 = sbr.rel (%p535) target = $region56
        $region55: #{tpu_custom_call.1} parent=51 // pred_region
          %s538 = sand.u32 %s141, 1
          %s539 = scalar_lea.sflag [#allocation4], %s538
          %s540 = sand.u32 %s141, 1
          %s541 = smul.addr %s540, 64
          %s542 = scalar_lea.vmem [#allocation5], %s541
          %543 = dma.done %s539, 1024
        $region56: #{tpu_custom_call.1} parent=51 // pred_fallthru
          _
      $region52: #{tpu_custom_call.1} parent=5 // pred_fallthru
        _
    $region6: #{tpu_custom_call.1} parent=1 // loop_footer
      %s21 = sadd.s32 1, %s17
    $region7: #{tpu_custom_call.1} parent=1 // loop_footer_branch
      %16 = sbr.rel target = $region3
    $region8: #{tpu_custom_call.1} parent=1 // loop_exit
      _
    %544 = vsyncpa [#allocation3], 1
    %s545 = scalar_lea.sflag [#allocation3], 1
    %546 = vsyncpa %s545, 1
    %547 = vsyncpa [#allocation4], 1
    %s548 = scalar_lea.sflag [#allocation4], 1
    %549 = vsyncpa %s548, 1

</llo_original>
